<compile_context>
chip_gen: v5e
topology: v5e:2x2
jax: 0.10.0
libtpu: 0.0.40
codegen_flags: <defaults>
</compile_context>

<pallas_src>
import jax
import jax.numpy as jnp
from jax.experimental import pallas as pl
from jax.experimental.pallas import tpu as pltpu

LANE = 128
SUBLANE = 8
IN_F = 3
HID_F = 2
OUT_F = 1

# Max 128-lane rows of batch per grid step (2048 rows = 262144 batch elems).
# Double-buffered input block: 3*2048*128*4 B * 2 = 6 MiB; output: 2 MiB.
TR_CAP = 2048


def _mlp_kernel(p_ref, x_ref, o_ref):
    """Fused 3->2->1 MLP on a dense (TR, 128) batch slab per feature.

    p_ref : SMEM (11,) f32 packed as [w1[:,0], w1[:,1], b1[0:2], w2[:,0], b2[0]]
    x_ref : VMEM (IN_F, TR, 128) f32  (feature, batch-sublane, batch-lane)
    o_ref : VMEM (TR, 128) f32        (lane- and sublane-dense output)
    """
    x0 = x_ref[0]            # (TR, 128)
    x1 = x_ref[1]
    x2 = x_ref[2]

    # dense1 + ReLU: pure VPU broadcast FMAs on full vregs.
    h0 = jnp.maximum(x0 * p_ref[0] + x1 * p_ref[1] + x2 * p_ref[2] + p_ref[6], 0.0)
    h1 = jnp.maximum(x0 * p_ref[3] + x1 * p_ref[4] + x2 * p_ref[5] + p_ref[7], 0.0)

    # dense2
    o_ref[...] = (h0 * p_ref[8] + h1 * p_ref[9] + p_ref[10]).astype(o_ref.dtype)


def _pick_tiling(R):
    """Choose (TR rows per step, num_tiles, padded rows Rp) for R batch rows."""
    if R < 2 * SUBLANE:
        # Single small tile; block dim equals the full array dim (allowed).
        return R, 1, R
    # >= 2 grid steps so the parallel axis can feed both v7x TensorCores.
    num_tiles = max(pl.cdiv(R, TR_CAP), 2)
    TR = ((pl.cdiv(R, num_tiles) + SUBLANE - 1) // SUBLANE) * SUBLANE
    num_tiles = pl.cdiv(R, TR)
    return TR, num_tiles, num_tiles * TR


def _pack_params(w1, b1, w2, b2):
    # [w1[:,0], w1[:,1], b1[0], b1[1], w2[0,0], w2[1,0], b2[0]] -> (11,)
    return jnp.concatenate([w1[:, 0], w1[:, 1], b1, w2[:, 0], b2]).astype(jnp.float32)


@jax.jit
def model1_forward_fm(x_fm, w1, b1, w2, b2):
    """Feature-major fast path. x_fm: (3, B) f32. Returns (B, 1) f32."""
    B = x_fm.shape[1]
    if B == 0:  # static shape guard
        return jnp.zeros((0, OUT_F), jnp.float32)

    R = pl.cdiv(B, LANE)                 # 128-lane batch rows
    TR, num_tiles, Rp = _pick_tiling(R)
    Bp = Rp * LANE

    # Pad batch (padded columns give relu(b1)@w2+b2, sliced off below), then
    # a FREE reshape to (feature, sublane-row, lane) — no transpose needed.
    x_pad = jnp.pad(x_fm.astype(jnp.float32), ((0, 0), (0, Bp - B)))
    x3 = x_pad.reshape(IN_F, Rp, LANE)

    params = _pack_params(w1, b1, w2, b2)

    out = pl.pallas_call(
        _mlp_kernel,
        out_shape=jax.ShapeDtypeStruct((Rp, LANE), jnp.float32),
        grid=(num_tiles,),
        in_specs=[
            pl.BlockSpec(memory_space=pltpu.MemorySpace.SMEM),
            pl.BlockSpec((IN_F, TR, LANE), lambda i: (0, i, 0)),
        ],
        out_specs=pl.BlockSpec((TR, LANE), lambda i: (i, 0)),
        compiler_params=pltpu.CompilerParams(
            dimension_semantics=("parallel",)
        ),
    )(params, x3)

    # Free reshape back to flat batch order, drop padding, shape (B, 1).
    return out.reshape(Bp)[:B].reshape(B, OUT_F)


@jax.jit
def model1_forward(x, w1, b1, w2, b2):
    """x: (B, 3) f32 (PyTorch-style batch-major). Returns (B, 1) f32.

    The transpose below is the only extra HBM traffic; producers that can
    hand over a feature-major (3, B) tensor should call model1_forward_fm.
    """
    # TODO(synk): have upstream produce feature-major (3, B) activations to
    # drop this transpose entirely (review item 3).
    return model1_forward_fm(x.T, w1, b1, w2, b2)


def _xavier_uniform(key, shape_out_in):
    """Matches torch.nn.init.xavier_uniform_ on a (out, in) weight."""
    fan_out, fan_in = shape_out_in
    bound = (6.0 / (fan_in + fan_out)) ** 0.5
    return jax.random.uniform(
        key, shape_out_in, jnp.float32, minval=-bound, maxval=bound
    )


def init_params(key):
    k1, k2 = jax.random.split(key)
    # PyTorch Linear stores weight as (out, in); transpose to (in, out).
    w1 = _xavier_uniform(k1, (HID_F, IN_F)).T    # (3, 2)
    b1 = jnp.full((HID_F,), 0.1, jnp.float32)
    w2 = _xavier_uniform(k2, (OUT_F, HID_F)).T   # (2, 1)
    b2 = jnp.full((OUT_F,), 0.1, jnp.float32)
    return w1, b1, w2, b2


if __name__ == "__main__":
    key = jax.random.PRNGKey(0)
    k_params, k_x1, k_x2, k_x3 = jax.random.split(key, 4)

    w1, b1, w2, b2 = init_params(k_params)

    def ref(x):
        return jnp.maximum(x @ w1 + b1, 0.0) @ w2 + b2

    # Small batch (single 128-lane row), non-128-multiple batch (single tile,
    # 8 rows), and a batch large enough to exercise the 2-tile parallel grid.
    for kx, batch in ((k_x1, 8), (k_x2, 1000), (k_x3, 2500)):
        x = jax.random.normal(kx, (batch, IN_F), jnp.float32)
        y = jax.block_until_ready(model1_forward(x, w1, b1, w2, b2))
        assert y.shape == (batch, OUT_F)
        assert jnp.allclose(y, ref(x), atol=1e-5, rtol=1e-5)

    # Feature-major fast path (no transpose) must agree too.
    x_fm = jax.random.normal(k_x2, (1000, IN_F), jnp.float32)
    y_fm = jax.block_until_ready(model1_forward_fm(x_fm.T, w1, b1, w2, b2))
    assert jnp.allclose(y_fm, ref(x_fm), atol=1e-5, rtol=1e-5)

    print("KERNEL_OK")
</pallas_src>

<mosaic_0001>
module attributes {stable_mosaic.version = 11 : i64} {
  func.func @_mlp_kernel(%arg0: i32, %arg1: memref<11xf32, #tpu.memory_space<smem>>, %arg2: memref<3x1x128xf32, #tpu.memory_space<vmem>>, %arg3: memref<1x128xf32, #tpu.memory_space<vmem>>) attributes {dimension_semantics = [#tpu.dimension_semantics<parallel>], iteration_bounds = array<i64: 1>, scalar_prefetch = 0 : i64, scratch_operands = 0 : i64, tpu.core_type = #tpu.core_type<tc>, window_params = [{transform_indices = @transform_0, window_bounds = array<i64: 11>}, {transform_indices = @transform_1, window_bounds = array<i64: 3, 1, 128>}, {transform_indices = @transform_2, window_bounds = array<i64: 1, 128>}]} {
    %c0 = arith.constant 0 : index
    %c0_0 = arith.constant 0 : index
    %c0_1 = arith.constant 0 : index
    %0 = vector.load %arg2[%c0, %c0_0, %c0_1] : memref<3x1x128xf32, #tpu.memory_space<vmem>>, vector<1x1x128xf32>
    %1 = vector.shape_cast %0 : vector<1x1x128xf32> to vector<1x128xf32>
    %c1 = arith.constant 1 : index
    %c0_2 = arith.constant 0 : index
    %c0_3 = arith.constant 0 : index
    %2 = vector.load %arg2[%c1, %c0_2, %c0_3] : memref<3x1x128xf32, #tpu.memory_space<vmem>>, vector<1x1x128xf32>
    %3 = vector.shape_cast %2 : vector<1x1x128xf32> to vector<1x128xf32>
    %c2 = arith.constant 2 : index
    %c0_4 = arith.constant 0 : index
    %c0_5 = arith.constant 0 : index
    %4 = vector.load %arg2[%c2, %c0_4, %c0_5] : memref<3x1x128xf32, #tpu.memory_space<vmem>>, vector<1x1x128xf32>
    %5 = vector.shape_cast %4 : vector<1x1x128xf32> to vector<1x128xf32>
    %c0_6 = arith.constant 0 : index
    %6 = memref.load %arg1[%c0_6] : memref<11xf32, #tpu.memory_space<smem>>
    %7 = vector.broadcast %6 : f32 to vector<1x128xf32>
    %8 = arith.mulf %1, %7 : vector<1x128xf32>
    %c1_7 = arith.constant 1 : index
    %9 = memref.load %arg1[%c1_7] : memref<11xf32, #tpu.memory_space<smem>>
    %10 = vector.broadcast %9 : f32 to vector<1x128xf32>
    %11 = arith.mulf %3, %10 : vector<1x128xf32>
    %12 = arith.addf %8, %11 : vector<1x128xf32>
    %c2_8 = arith.constant 2 : index
    %13 = memref.load %arg1[%c2_8] : memref<11xf32, #tpu.memory_space<smem>>
    %14 = vector.broadcast %13 : f32 to vector<1x128xf32>
    %15 = arith.mulf %5, %14 : vector<1x128xf32>
    %16 = arith.addf %12, %15 : vector<1x128xf32>
    %c6 = arith.constant 6 : index
    %17 = memref.load %arg1[%c6] : memref<11xf32, #tpu.memory_space<smem>>
    %18 = vector.broadcast %17 : f32 to vector<1x128xf32>
    %19 = arith.addf %16, %18 : vector<1x128xf32>
    %cst = arith.constant 0.000000e+00 : f32
    %20 = vector.broadcast %cst : f32 to vector<1x128xf32>
    %21 = arith.maximumf %19, %20 : vector<1x128xf32>
    %c3 = arith.constant 3 : index
    %22 = memref.load %arg1[%c3] : memref<11xf32, #tpu.memory_space<smem>>
    %23 = vector.broadcast %22 : f32 to vector<1x128xf32>
    %24 = arith.mulf %1, %23 : vector<1x128xf32>
    %c4 = arith.constant 4 : index
    %25 = memref.load %arg1[%c4] : memref<11xf32, #tpu.memory_space<smem>>
    %26 = vector.broadcast %25 : f32 to vector<1x128xf32>
    %27 = arith.mulf %3, %26 : vector<1x128xf32>
    %28 = arith.addf %24, %27 : vector<1x128xf32>
    %c5 = arith.constant 5 : index
    %29 = memref.load %arg1[%c5] : memref<11xf32, #tpu.memory_space<smem>>
    %30 = vector.broadcast %29 : f32 to vector<1x128xf32>
    %31 = arith.mulf %5, %30 : vector<1x128xf32>
    %32 = arith.addf %28, %31 : vector<1x128xf32>
    %c7 = arith.constant 7 : index
    %33 = memref.load %arg1[%c7] : memref<11xf32, #tpu.memory_space<smem>>
    %34 = vector.broadcast %33 : f32 to vector<1x128xf32>
    %35 = arith.addf %32, %34 : vector<1x128xf32>
    %cst_9 = arith.constant 0.000000e+00 : f32
    %36 = vector.broadcast %cst_9 : f32 to vector<1x128xf32>
    %37 = arith.maximumf %35, %36 : vector<1x128xf32>
    %c8 = arith.constant 8 : index
    %38 = memref.load %arg1[%c8] : memref<11xf32, #tpu.memory_space<smem>>
    %39 = vector.broadcast %38 : f32 to vector<1x128xf32>
    %40 = arith.mulf %21, %39 : vector<1x128xf32>
    %c9 = arith.constant 9 : index
    %41 = memref.load %arg1[%c9] : memref<11xf32, #tpu.memory_space<smem>>
    %42 = vector.broadcast %41 : f32 to vector<1x128xf32>
    %43 = arith.mulf %37, %42 : vector<1x128xf32>
    %44 = arith.addf %40, %43 : vector<1x128xf32>
    %c10 = arith.constant 10 : index
    %45 = memref.load %arg1[%c10] : memref<11xf32, #tpu.memory_space<smem>>
    %46 = vector.broadcast %45 : f32 to vector<1x128xf32>
    %47 = arith.addf %44, %46 : vector<1x128xf32>
    %c0_10 = arith.constant 0 : index
    %c0_11 = arith.constant 0 : index
    %48 = vector.load %arg3[%c0_10, %c0_11] : memref<1x128xf32, #tpu.memory_space<vmem>>, vector<1x128xf32>
    tpu.vector_store %arg3[%c0_10, %c0_11], %47 {strides = array<i32>} : memref<1x128xf32, #tpu.memory_space<vmem>>, vector<1x128xf32>,
    return
  }
  func.func @transform_0(%arg0: i32) -> i32 {
    %c0_i32 = arith.constant 0 : i32
    %c0_i32_0 = arith.constant 0 : i32
    return %c0_i32 : i32
  }
  func.func @transform_1(%arg0: i32) -> (i32, i32, i32) {
    %c0_i32 = arith.constant 0 : i32
    %c0_i32_0 = arith.constant 0 : i32
    %c0_i32_1 = arith.constant 0 : i32
    return %c0_i32, %arg0, %c0_i32_0 : i32, i32, i32
  }
  func.func @transform_2(%arg0: i32) -> (i32, i32) {
    %c0_i32 = arith.constant 0 : i32
    %c0_i32_0 = arith.constant 0 : i32
    return %arg0, %c0_i32 : i32, i32
  }
}

</mosaic_0001>

<llo_original>
// kernel: model1_forward_fm.1
$region0: #{model1_forward_fm.1}
  #allocation0 [shape = 'u32[]', space=smem, size = 0x4, offset = 0x4, fixed_abs, tag = 'smem constant byte address 0x4 - core index']
  #allocation1 [shape = 'u32[72,128]{1,0:T(1,128)}', space=vmem, size = 0x9000, scoped, tag = 'internal scratch']
  %s0 = inlined_call_operand.vmem [shape: f32[11], index: 0, kind: input, shape index: {}]
  %s1 = inlined_call_operand.vmem [shape: f32[3,1,128], index: 1, kind: input, shape index: {}]
  %s2 = inlined_call_operand.vmem [shape: f32[1,128], index: 2, kind: output, shape index: {}]
  %s3 = sld [smem:[#allocation0]]
  $region22: #{model1_forward_fm.1} parent=0
    _
  %s5 = ssub.s32 1, %s3
  %s6 = scalar_select 0, %s5, %s3
  $region1: #{model1_forward_fm.1} parent=0
    #allocation2 [shape = 'u8[512]{0}', space=smem, size = 0x200, scoped, tag = 'input window, operand 0, single buffered']
    #allocation3 [shape = 's32[1]{0}', space=sflag, size = 0x4, scoped, tag = 'scoped memory for model1_forward_fm.1']
    %7 = vsyncpa [#allocation3], 0
    // Predicated region
    $region2: #{model1_forward_fm.1} parent=1 // pred_check
      _
    $region3: #{model1_forward_fm.1} parent=1 // pred_check_branch
      %9 = sbr.rel (0) target = $region5
    $region4: #{model1_forward_fm.1} parent=1 // pred_region
      %11 = vsyncadd [#allocation3], 0
      %s13 = sshll.u32 %s0, 4
      %s14 = int_to_ptr.vmem [resolvable:$true] %s13
      %16 = dma.vmem_to_smem %s14, 16, [#allocation2], [#allocation3]
    $region5: #{model1_forward_fm.1} parent=1 // pred_fallthru
      _
    // Predicated region
    $region6: #{model1_forward_fm.1} parent=1 // pred_check
      _
    $region7: #{model1_forward_fm.1} parent=1 // pred_check_branch
      %18 = sbr.rel (0) target = $region9
    $region8: #{model1_forward_fm.1} parent=1 // pred_region
      _
    $region9: #{model1_forward_fm.1} parent=1 // pred_fallthru
      _
    // Predicated region
    $region10: #{model1_forward_fm.1} parent=1 // pred_check
      _
    $region11: #{model1_forward_fm.1} parent=1 // pred_check_branch
      %20 = sbr.rel (0) target = $region13
    $region12: #{model1_forward_fm.1} parent=1 // pred_region
      %22 = dma.done [#allocation3], 16
    $region13: #{model1_forward_fm.1} parent=1 // pred_fallthru
      _
    %23 = sfence
    %v24 = vld [vmem:[%s1] sm:$0x1]
    %s25 = scalar_lea.vmem %s1, 1
    %v26 = vld [vmem:[%s25] sm:$0x1]
    %s27 = scalar_lea.vmem %s1, 2
    %v28 = vld [vmem:[%s27] sm:$0x1]
    %s29 = sld [smem:[#allocation2]]
    %v30 = vstv %s29
    %v31 = vmul.f32 %v24, %v30
    %s32 = sld [smem:[#allocation2 + $0x1]]
    %v33 = vstv %s32
    %v34 = vmul.f32 %v26, %v33
    %v35 = vadd.f32 %v31, %v34
    %s36 = sld [smem:[#allocation2 + $0x2]]
    %v37 = vstv %s36
    %v38 = vmul.f32 %v28, %v37
    %v39 = vadd.f32 %v35, %v38
    %s40 = sld [smem:[#allocation2 + $0x6]]
    %v41 = vstv %s40
    %v42 = vadd.f32 %v39, %v41
    %v43 = vmax.f32 %v42, 0.0
    %s44 = sld [smem:[#allocation2 + $0x3]]
    %v45 = vstv %s44
    %v46 = vmul.f32 %v24, %v45
    %s47 = sld [smem:[#allocation2 + $0x4]]
    %v48 = vstv %s47
    %v49 = vmul.f32 %v26, %v48
    %v50 = vadd.f32 %v46, %v49
    %s51 = sld [smem:[#allocation2 + $0x5]]
    %v52 = vstv %s51
    %v53 = vmul.f32 %v28, %v52
    %v54 = vadd.f32 %v50, %v53
    %s55 = sld [smem:[#allocation2 + $0x7]]
    %v56 = vstv %s55
    %v57 = vadd.f32 %v54, %v56
    %v58 = vmax.f32 %v57, 0.0
    %s59 = sld [smem:[#allocation2 + $0x8]]
    %v60 = vstv %s59
    %v61 = vmul.f32 %v43, %v60
    %s62 = sld [smem:[#allocation2 + $0x9]]
    %v63 = vstv %s62
    %v64 = vmul.f32 %v58, %v63
    %v65 = vadd.f32 %v61, %v64
    %s66 = sld [smem:[#allocation2 + $0xa]]
    %v67 = vstv %s66
    %v68 = vadd.f32 %v65, %v67
    %69 = vst [vmem:[%s2] sm:$0x1] %v68
    // Predicated region
    $region14: #{model1_forward_fm.1} parent=1 // pred_check
      _
    $region15: #{model1_forward_fm.1} parent=1 // pred_check_branch
      %71 = sbr.rel (0) target = $region17
    $region16: #{model1_forward_fm.1} parent=1 // pred_region
      _
    $region17: #{model1_forward_fm.1} parent=1 // pred_fallthru
      _
    // Predicated region
    $region18: #{model1_forward_fm.1} parent=1 // pred_check
      _
    $region19: #{model1_forward_fm.1} parent=1 // pred_check_branch
      %73 = sbr.rel (0) target = $region21
    $region20: #{model1_forward_fm.1} parent=1 // pred_region
      _
    $region21: #{model1_forward_fm.1} parent=1 // pred_fallthru
      _
    %74 = vsyncpa [#allocation3], 1

</llo_original>
